<compile_context>
chip_gen: v5e
topology: v5e:2x2
jax: 0.10.0
libtpu: 0.0.40
codegen_flags: <defaults>
</compile_context>

<pallas_src>
import functools

import jax
import jax.numpy as jnp
from jax.experimental import pallas as pl
from jax.experimental.pallas import tpu as pltpu

LN_EPS = 1e-5  # PyTorch nn.LayerNorm default


def _round_up(x, m):
    return ((x + m - 1) // m) * m


def _pad2(a, rows, cols, dtype=None):
    """Zero-pad a 2-D array to (rows, cols), optionally casting dtype."""
    dt = a.dtype if dtype is None else dtype
    out = jnp.zeros((rows, cols), dt)
    return out.at[: a.shape[0], : a.shape[1]].set(a.astype(dt))


def _actor_kernel(true_widths,
                  mx_ref, x_ref,
                  w1_ref, b1_ref, g1_ref, be1_ref,
                  w2_ref, b2_ref, g2_ref, be2_ref,
                  w3_ref, b3_ref, g3_ref, be3_ref,
                  w4_ref, b4_ref,
                  o_ref):
    """Fused (Linear -> LayerNorm -> ReLU) x3 -> Linear -> tanh * maxaction."""
    n1, n3 = true_widths          # true (unpadded) hidden widths
    maxaction = mx_ref[0, 0]      # runtime scalar from SMEM (no recompile on change)

    def ln_relu_layer(x_bf16, w_ref, b_ref, g_ref, beta_ref, true_n):
        # bf16 x bf16 -> f32 accumulation on the MXU.
        h = jnp.dot(x_bf16, w_ref[...], preferred_element_type=jnp.float32)
        h = h + b_ref[...]
        inv_n = jnp.float32(1.0 / true_n)
        # Padded lanes of h are exactly 0 (zero-padded W columns / bias), so
        # summing all lanes and dividing by the TRUE width gives the exact
        # masked mean / E[h^2] — no iota/where mask needed.
        mu = jnp.sum(h, axis=-1, keepdims=True) * inv_n
        ex2 = jnp.sum(h * h, axis=-1, keepdims=True) * inv_n
        var = jnp.maximum(ex2 - mu * mu, 0.0)          # guard f32 cancellation
        hn = (h - mu) * jax.lax.rsqrt(var + LN_EPS)
        hn = hn * g_ref[...] + beta_ref[...]           # padded gamma/beta = 0 -> lanes stay 0
        return jnp.maximum(hn, 0.0).astype(jnp.bfloat16)

    x = x_ref[...].astype(jnp.bfloat16)                # cast in-kernel (true K width)
    a = ln_relu_layer(x, w1_ref, b1_ref, g1_ref, be1_ref, n1)
    a = ln_relu_layer(a, w2_ref, b2_ref, g2_ref, be2_ref, n1)
    a = ln_relu_layer(a, w3_ref, b3_ref, g3_ref, be3_ref, n3)
    out = jnp.dot(a, w4_ref[...], preferred_element_type=jnp.float32) + b4_ref[...]
    # Lane-dense (tb, 128) store; tanh/mul run in f32 on EUP/VPU.
    o_ref[...] = (jnp.tanh(out) * maxaction).astype(o_ref.dtype)


def prepare_actor_params(params):
    """Pad / cast the Actor parameters ONCE.

    Call this at setup time and reuse the result on every forward step — this
    removes the per-call pad/cast XLA ops and HBM round-trips that otherwise
    dominate wall clock for a network this small.
    """
    state_dim, net_width = params["w1"].shape
    half = params["w3"].shape[1]
    action_dim = params["w4"].shape[1]

    # Lane-dense padded widths (multiples of 128). Note: on v6e/v7x a hidden
    # width that is a multiple of 256 fills the 256x256 MXU better.
    n1p = _round_up(net_width, 128)
    n3p = _round_up(half, 128)
    n4p = _round_up(action_dim, 128)

    # MXU operands (weights) in bf16; bias / LayerNorm affine in f32.
    # w1 keeps its TRUE K (state_dim) — only the output width is padded.
    prepared = (
        _pad2(params["w1"], state_dim, n1p, jnp.bfloat16),
        _pad2(params["b1"], 1, n1p, jnp.float32),
        _pad2(params["g1"], 1, n1p, jnp.float32),
        _pad2(params["beta1"], 1, n1p, jnp.float32),
        _pad2(params["w2"], n1p, n1p, jnp.bfloat16),
        _pad2(params["b2"], 1, n1p, jnp.float32),
        _pad2(params["g2"], 1, n1p, jnp.float32),
        _pad2(params["beta2"], 1, n1p, jnp.float32),
        _pad2(params["w3"], n1p, n3p, jnp.bfloat16),
        _pad2(params["b3"], 1, n3p, jnp.float32),
        _pad2(params["g3"], 1, n3p, jnp.float32),
        _pad2(params["beta3"], 1, n3p, jnp.float32),
        _pad2(params["w4"], n3p, n4p, jnp.bfloat16),
        _pad2(params["b4"], 1, n4p, jnp.float32),
    )
    meta = dict(state_dim=state_dim, net_width=net_width, half=half,
                action_dim=action_dim, n1p=n1p, n3p=n3p, n4p=n4p)
    return prepared, meta


def _choose_batch_tile(B, batch_tile):
    """bf16-friendly (multiple of 16) batch tile; >=2 grid steps when possible."""
    batch_tile = max(16, _round_up(batch_tile, 16))
    if B <= 16:
        return 16
    # Aim for at least 2 grid steps so the "parallel" axis can shard across
    # both TensorCores on v7x (no effect on single-TC v5e/v6e).
    return min(batch_tile, _round_up(pl.cdiv(B, 2), 16))


def actor_forward(state, prepared, meta, maxaction, *, batch_tile=512, out_dtype=None):
    """Whole Actor forward in one pallas_call with a batch-tiled parallel grid."""
    B, state_dim = state.shape
    assert state_dim == meta["state_dim"], (state_dim, meta["state_dim"])
    n4p = meta["n4p"]
    out_dtype = state.dtype if out_dtype is None else out_dtype

    tb = _choose_batch_tile(B, batch_tile)
    bp = _round_up(B, tb)
    grid = (bp // tb,)
    if bp != B:
        # Only the batch axis is padded; the feature axis keeps its true width
        # (full-extent last dim is allowed by the (8,128) block rule).
        state = jnp.pad(state, ((0, bp - B), (0, 0)))

    mx = jnp.full((1, 1), maxaction, jnp.float32)

    def resident(a):
        # Whole array, constant block index -> VMEM-resident across grid steps.
        # Constant blocks need no double-buffering -> single buffer halves their
        # VMEM residency (matters on v7x's 64 MiB VMEM for large net_width).
        return pl.BlockSpec(a.shape, lambda i: (0, 0),
                            pipeline_mode=pl.Buffered(1))

    in_specs = [
        pl.BlockSpec(memory_space=pltpu.MemorySpace.SMEM),   # maxaction scalar
        pl.BlockSpec((tb, state_dim), lambda i: (i, 0)),     # batch tile, true K
    ] + [resident(a) for a in prepared]

    # Explicit scoped-VMEM budget: single-buffered residents + double-buffered
    # activation tiles, clamped to a range valid on v5e/v6e/v7x.
    resident_bytes = sum(int(a.size) * a.dtype.itemsize for a in prepared)
    tile_bytes = (tb * state_dim * state.dtype.itemsize
                  + tb * n4p * jnp.dtype(out_dtype).itemsize)
    vmem_limit = int(min(64 << 20,
                         max(32 << 20, 2 * resident_bytes + 4 * tile_bytes + (1 << 20))))

    out = pl.pallas_call(
        functools.partial(_actor_kernel, (meta["net_width"], meta["half"])),
        out_shape=jax.ShapeDtypeStruct((bp, n4p), out_dtype),
        grid_spec=pltpu.PrefetchScalarGridSpec(
            num_scalar_prefetch=0,
            grid=grid,
            in_specs=in_specs,
            out_specs=pl.BlockSpec((tb, n4p), lambda i: (i, 0)),
        ),
        compiler_params=pltpu.CompilerParams(
            dimension_semantics=("parallel",),
            vmem_limit_bytes=vmem_limit),
    )(mx, state, *prepared)

    return out[:B, :meta["action_dim"]]


def init_actor_params(key, state_dim, action_dim, net_width):
    """Deterministic init mirroring PyTorch nn.Linear default (U[-1/sqrt(in), 1/sqrt(in)])."""
    half = net_width // 2
    dims = [(state_dim, net_width), (net_width, net_width),
            (net_width, half), (half, action_dim)]
    params = {}
    keys = jax.random.split(key, 2 * len(dims))
    for i, (din, dout) in enumerate(dims):
        bound = 1.0 / jnp.sqrt(jnp.float32(din))
        w = jax.random.uniform(keys[2 * i], (din, dout), jnp.float32, -bound, bound)
        b = jax.random.uniform(keys[2 * i + 1], (1, dout), jnp.float32, -bound, bound)
        params[f"w{i + 1}"] = w
        params[f"b{i + 1}"] = b
    # LayerNorm affine params: gamma=1, beta=0 (PyTorch default init).
    for i, dout in enumerate([net_width, net_width, half], start=1):
        params[f"g{i}"] = jnp.ones((1, dout), jnp.float32)
        params[f"beta{i}"] = jnp.zeros((1, dout), jnp.float32)
    return params


def actor_reference(state, params, maxaction):
    """Pure-JAX reference matching the kernel's dtype policy (bf16 matmul, f32 elsewhere)."""
    def dot_bf16(x, w):
        return jnp.dot(x.astype(jnp.bfloat16), w.astype(jnp.bfloat16),
                       preferred_element_type=jnp.float32)

    def layer(x, w, b, g, beta):
        h = dot_bf16(x, w) + b
        mu = jnp.mean(h, axis=-1, keepdims=True)
        var = jnp.mean((h - mu) ** 2, axis=-1, keepdims=True)
        hn = (h - mu) * jax.lax.rsqrt(var + LN_EPS)
        return jax.nn.relu(hn * g + beta)

    a = layer(state, params["w1"], params["b1"], params["g1"], params["beta1"])
    a = layer(a, params["w2"], params["b2"], params["g2"], params["beta2"])
    a = layer(a, params["w3"], params["b3"], params["g3"], params["beta3"])
    return jnp.tanh(dot_bf16(a, params["w4"]) + params["b4"]) * maxaction


if __name__ == "__main__":
    key = jax.random.PRNGKey(0)
    k_param, k_state = jax.random.split(key)

    batch = 2
    state_dim = 16
    action_dim = 4
    net_width = 32
    maxaction = 2.0

    params = init_actor_params(k_param, state_dim, action_dim, net_width)
    state = jax.random.normal(k_state, (batch, state_dim), jnp.float32)

    # Pad / cast params ONCE; reuse `prepared` on every forward step.
    prepared, meta = prepare_actor_params(params)
    prepared = jax.block_until_ready(prepared)

    out = actor_forward(state, prepared, meta, maxaction)
    out = jax.block_until_ready(out)

    ref = actor_reference(state, params, maxaction)
    assert out.shape == (batch, action_dim), out.shape
    assert jnp.allclose(out, ref, atol=1e-2, rtol=1e-2), (out, ref)

    print("KERNEL_OK")
</pallas_src>

<mosaic_0001>
module attributes {stable_mosaic.version = 11 : i64} {
  func.func @_actor_kernel(%arg0: i32, %arg1: memref<1x1xf32, #tpu.memory_space<smem>>, %arg2: memref<16x16xf32, #tpu.memory_space<vmem>>, %arg3: memref<16x128xbf16, #tpu.memory_space<vmem>>, %arg4: memref<1x128xf32, #tpu.memory_space<vmem>>, %arg5: memref<1x128xf32, #tpu.memory_space<vmem>>, %arg6: memref<1x128xf32, #tpu.memory_space<vmem>>, %arg7: memref<128x128xbf16, #tpu.memory_space<vmem>>, %arg8: memref<1x128xf32, #tpu.memory_space<vmem>>, %arg9: memref<1x128xf32, #tpu.memory_space<vmem>>, %arg10: memref<1x128xf32, #tpu.memory_space<vmem>>, %arg11: memref<128x128xbf16, #tpu.memory_space<vmem>>, %arg12: memref<1x128xf32, #tpu.memory_space<vmem>>, %arg13: memref<1x128xf32, #tpu.memory_space<vmem>>, %arg14: memref<1x128xf32, #tpu.memory_space<vmem>>, %arg15: memref<128x128xbf16, #tpu.memory_space<vmem>>, %arg16: memref<1x128xf32, #tpu.memory_space<vmem>>, %arg17: memref<16x128xf32, #tpu.memory_space<vmem>>) attributes {dimension_semantics = [#tpu.dimension_semantics<parallel>], iteration_bounds = array<i64: 1>, scalar_prefetch = 0 : i64, scratch_operands = 0 : i64, tpu.core_type = #tpu.core_type<tc>, window_params = [{transform_indices = @transform_0, window_bounds = array<i64: 1, 1>}, {transform_indices = @transform_1, window_bounds = array<i64: 16, 16>}, {pipeline_mode = #tpu.pipeline_mode<synchronous>, transform_indices = @transform_2, window_bounds = array<i64: 16, 128>}, {pipeline_mode = #tpu.pipeline_mode<synchronous>, transform_indices = @transform_3, window_bounds = array<i64: 1, 128>}, {pipeline_mode = #tpu.pipeline_mode<synchronous>, transform_indices = @transform_4, window_bounds = array<i64: 1, 128>}, {pipeline_mode = #tpu.pipeline_mode<synchronous>, transform_indices = @transform_5, window_bounds = array<i64: 1, 128>}, {pipeline_mode = #tpu.pipeline_mode<synchronous>, transform_indices = @transform_6, window_bounds = array<i64: 128, 128>}, {pipeline_mode = #tpu.pipeline_mode<synchronous>, transform_indices = @transform_7, window_bounds = array<i64: 1, 128>}, {pipeline_mode = #tpu.pipeline_mode<synchronous>, transform_indices = @transform_8, window_bounds = array<i64: 1, 128>}, {pipeline_mode = #tpu.pipeline_mode<synchronous>, transform_indices = @transform_9, window_bounds = array<i64: 1, 128>}, {pipeline_mode = #tpu.pipeline_mode<synchronous>, transform_indices = @transform_10, window_bounds = array<i64: 128, 128>}, {pipeline_mode = #tpu.pipeline_mode<synchronous>, transform_indices = @transform_11, window_bounds = array<i64: 1, 128>}, {pipeline_mode = #tpu.pipeline_mode<synchronous>, transform_indices = @transform_12, window_bounds = array<i64: 1, 128>}, {pipeline_mode = #tpu.pipeline_mode<synchronous>, transform_indices = @transform_13, window_bounds = array<i64: 1, 128>}, {pipeline_mode = #tpu.pipeline_mode<synchronous>, transform_indices = @transform_14, window_bounds = array<i64: 128, 128>}, {pipeline_mode = #tpu.pipeline_mode<synchronous>, transform_indices = @transform_15, window_bounds = array<i64: 1, 128>}, {transform_indices = @transform_16, window_bounds = array<i64: 16, 128>}]} {
    %c0 = arith.constant 0 : index
    %c0_0 = arith.constant 0 : index
    %0 = memref.load %arg1[%c0, %c0_0] : memref<1x1xf32, #tpu.memory_space<smem>>
    %c0_1 = arith.constant 0 : index
    %c0_2 = arith.constant 0 : index
    %1 = vector.load %arg2[%c0_1, %c0_2] : memref<16x16xf32, #tpu.memory_space<vmem>>, vector<16x16xf32>
    %2 = arith.truncf %1 : vector<16x16xf32> to vector<16x16xbf16>
    %c0_3 = arith.constant 0 : index
    %c0_4 = arith.constant 0 : index
    %3 = vector.load %arg3[%c0_3, %c0_4] : memref<16x128xbf16, #tpu.memory_space<vmem>>, vector<16x128xbf16>
    %cst = arith.constant dense<0.000000e+00> : vector<16x128xf32>
    %4 = tpu.matmul %2, %3, %cst {dimension_numbers = #tpu.dot_dimension_numbers<[1], [0], [0], [1], [0, 0, 1, 1], [], []>} : vector<16x16xbf16>, vector<16x128xbf16>, vector<16x128xf32> -> vector<16x128xf32>
    %c0_5 = arith.constant 0 : index
    %c0_6 = arith.constant 0 : index
    %5 = vector.load %arg4[%c0_5, %c0_6] : memref<1x128xf32, #tpu.memory_space<vmem>>, vector<1x128xf32>
    %6 = vector.broadcast %5 : vector<1x128xf32> to vector<16x128xf32>
    %7 = arith.addf %4, %6 : vector<16x128xf32>
    %cst_7 = arith.constant dense<0.000000e+00> : vector<16xf32>
    %8 = vector.multi_reduction <add>, %7, %cst_7 [1] : vector<16x128xf32> to vector<16xf32>
    %9 = vector.shape_cast %8 : vector<16xf32> to vector<16x1xf32>
    %cst_8 = arith.constant 3.125000e-02 : f32
    %10 = vector.broadcast %cst_8 : f32 to vector<16x1xf32>
    %11 = arith.mulf %9, %10 : vector<16x1xf32>
    %12 = arith.mulf %7, %7 : vector<16x128xf32>
    %cst_9 = arith.constant dense<0.000000e+00> : vector<16xf32>
    %13 = vector.multi_reduction <add>, %12, %cst_9 [1] : vector<16x128xf32> to vector<16xf32>
    %14 = vector.shape_cast %13 : vector<16xf32> to vector<16x1xf32>
    %cst_10 = arith.constant 3.125000e-02 : f32
    %15 = vector.broadcast %cst_10 : f32 to vector<16x1xf32>
    %16 = arith.mulf %14, %15 : vector<16x1xf32>
    %17 = arith.mulf %11, %11 : vector<16x1xf32>
    %18 = arith.subf %16, %17 : vector<16x1xf32>
    %cst_11 = arith.constant 0.000000e+00 : f32
    %19 = vector.broadcast %cst_11 : f32 to vector<16x1xf32>
    %20 = arith.maximumf %18, %19 : vector<16x1xf32>
    %21 = vector.broadcast %11 : vector<16x1xf32> to vector<16x128xf32>
    %22 = arith.subf %7, %21 : vector<16x128xf32>
    %cst_12 = arith.constant 9.99999974E-6 : f32
    %23 = vector.broadcast %cst_12 : f32 to vector<16x1xf32>
    %24 = arith.addf %20, %23 : vector<16x1xf32>
    %25 = math.rsqrt %24 : vector<16x1xf32>
    %26 = vector.broadcast %25 : vector<16x1xf32> to vector<16x128xf32>
    %27 = arith.mulf %22, %26 : vector<16x128xf32>
    %c0_13 = arith.constant 0 : index
    %c0_14 = arith.constant 0 : index
    %28 = vector.load %arg5[%c0_13, %c0_14] : memref<1x128xf32, #tpu.memory_space<vmem>>, vector<1x128xf32>
    %29 = vector.broadcast %28 : vector<1x128xf32> to vector<16x128xf32>
    %30 = arith.mulf %27, %29 : vector<16x128xf32>
    %c0_15 = arith.constant 0 : index
    %c0_16 = arith.constant 0 : index
    %31 = vector.load %arg6[%c0_15, %c0_16] : memref<1x128xf32, #tpu.memory_space<vmem>>, vector<1x128xf32>
    %32 = vector.broadcast %31 : vector<1x128xf32> to vector<16x128xf32>
    %33 = arith.addf %30, %32 : vector<16x128xf32>
    %cst_17 = arith.constant 0.000000e+00 : f32
    %34 = vector.broadcast %cst_17 : f32 to vector<16x128xf32>
    %35 = arith.maximumf %33, %34 : vector<16x128xf32>
    %36 = arith.truncf %35 : vector<16x128xf32> to vector<16x128xbf16>
    %c0_18 = arith.constant 0 : index
    %c0_19 = arith.constant 0 : index
    %37 = vector.load %arg7[%c0_18, %c0_19] : memref<128x128xbf16, #tpu.memory_space<vmem>>, vector<128x128xbf16>
    %cst_20 = arith.constant dense<0.000000e+00> : vector<16x128xf32>
    %38 = tpu.matmul %36, %37, %cst_20 {dimension_numbers = #tpu.dot_dimension_numbers<[1], [0], [0], [1], [0, 0, 1, 1], [], []>} : vector<16x128xbf16>, vector<128x128xbf16>, vector<16x128xf32> -> vector<16x128xf32>
    %c0_21 = arith.constant 0 : index
    %c0_22 = arith.constant 0 : index
    %39 = vector.load %arg8[%c0_21, %c0_22] : memref<1x128xf32, #tpu.memory_space<vmem>>, vector<1x128xf32>
    %40 = vector.broadcast %39 : vector<1x128xf32> to vector<16x128xf32>
    %41 = arith.addf %38, %40 : vector<16x128xf32>
    %cst_23 = arith.constant dense<0.000000e+00> : vector<16xf32>
    %42 = vector.multi_reduction <add>, %41, %cst_23 [1] : vector<16x128xf32> to vector<16xf32>
    %43 = vector.shape_cast %42 : vector<16xf32> to vector<16x1xf32>
    %cst_24 = arith.constant 3.125000e-02 : f32
    %44 = vector.broadcast %cst_24 : f32 to vector<16x1xf32>
    %45 = arith.mulf %43, %44 : vector<16x1xf32>
    %46 = arith.mulf %41, %41 : vector<16x128xf32>
    %cst_25 = arith.constant dense<0.000000e+00> : vector<16xf32>
    %47 = vector.multi_reduction <add>, %46, %cst_25 [1] : vector<16x128xf32> to vector<16xf32>
    %48 = vector.shape_cast %47 : vector<16xf32> to vector<16x1xf32>
    %cst_26 = arith.constant 3.125000e-02 : f32
    %49 = vector.broadcast %cst_26 : f32 to vector<16x1xf32>
    %50 = arith.mulf %48, %49 : vector<16x1xf32>
    %51 = arith.mulf %45, %45 : vector<16x1xf32>
    %52 = arith.subf %50, %51 : vector<16x1xf32>
    %cst_27 = arith.constant 0.000000e+00 : f32
    %53 = vector.broadcast %cst_27 : f32 to vector<16x1xf32>
    %54 = arith.maximumf %52, %53 : vector<16x1xf32>
    %55 = vector.broadcast %45 : vector<16x1xf32> to vector<16x128xf32>
    %56 = arith.subf %41, %55 : vector<16x128xf32>
    %cst_28 = arith.constant 9.99999974E-6 : f32
    %57 = vector.broadcast %cst_28 : f32 to vector<16x1xf32>
    %58 = arith.addf %54, %57 : vector<16x1xf32>
    %59 = math.rsqrt %58 : vector<16x1xf32>
    %60 = vector.broadcast %59 : vector<16x1xf32> to vector<16x128xf32>
    %61 = arith.mulf %56, %60 : vector<16x128xf32>
    %c0_29 = arith.constant 0 : index
    %c0_30 = arith.constant 0 : index
    %62 = vector.load %arg9[%c0_29, %c0_30] : memref<1x128xf32, #tpu.memory_space<vmem>>, vector<1x128xf32>
    %63 = vector.broadcast %62 : vector<1x128xf32> to vector<16x128xf32>
    %64 = arith.mulf %61, %63 : vector<16x128xf32>
    %c0_31 = arith.constant 0 : index
    %c0_32 = arith.constant 0 : index
    %65 = vector.load %arg10[%c0_31, %c0_32] : memref<1x128xf32, #tpu.memory_space<vmem>>, vector<1x128xf32>
    %66 = vector.broadcast %65 : vector<1x128xf32> to vector<16x128xf32>
    %67 = arith.addf %64, %66 : vector<16x128xf32>
    %cst_33 = arith.constant 0.000000e+00 : f32
    %68 = vector.broadcast %cst_33 : f32 to vector<16x128xf32>
    %69 = arith.maximumf %67, %68 : vector<16x128xf32>
    %70 = arith.truncf %69 : vector<16x128xf32> to vector<16x128xbf16>
    %c0_34 = arith.constant 0 : index
    %c0_35 = arith.constant 0 : index
    %71 = vector.load %arg11[%c0_34, %c0_35] : memref<128x128xbf16, #tpu.memory_space<vmem>>, vector<128x128xbf16>
    %cst_36 = arith.constant dense<0.000000e+00> : vector<16x128xf32>
    %72 = tpu.matmul %70, %71, %cst_36 {dimension_numbers = #tpu.dot_dimension_numbers<[1], [0], [0], [1], [0, 0, 1, 1], [], []>} : vector<16x128xbf16>, vector<128x128xbf16>, vector<16x128xf32> -> vector<16x128xf32>
    %c0_37 = arith.constant 0 : index
    %c0_38 = arith.constant 0 : index
    %73 = vector.load %arg12[%c0_37, %c0_38] : memref<1x128xf32, #tpu.memory_space<vmem>>, vector<1x128xf32>
    %74 = vector.broadcast %73 : vector<1x128xf32> to vector<16x128xf32>
    %75 = arith.addf %72, %74 : vector<16x128xf32>
    %cst_39 = arith.constant dense<0.000000e+00> : vector<16xf32>
    %76 = vector.multi_reduction <add>, %75, %cst_39 [1] : vector<16x128xf32> to vector<16xf32>
    %77 = vector.shape_cast %76 : vector<16xf32> to vector<16x1xf32>
    %cst_40 = arith.constant 6.250000e-02 : f32
    %78 = vector.broadcast %cst_40 : f32 to vector<16x1xf32>
    %79 = arith.mulf %77, %78 : vector<16x1xf32>
    %80 = arith.mulf %75, %75 : vector<16x128xf32>
    %cst_41 = arith.constant dense<0.000000e+00> : vector<16xf32>
    %81 = vector.multi_reduction <add>, %80, %cst_41 [1] : vector<16x128xf32> to vector<16xf32>
    %82 = vector.shape_cast %81 : vector<16xf32> to vector<16x1xf32>
    %cst_42 = arith.constant 6.250000e-02 : f32
    %83 = vector.broadcast %cst_42 : f32 to vector<16x1xf32>
    %84 = arith.mulf %82, %83 : vector<16x1xf32>
    %85 = arith.mulf %79, %79 : vector<16x1xf32>
    %86 = arith.subf %84, %85 : vector<16x1xf32>
    %cst_43 = arith.constant 0.000000e+00 : f32
    %87 = vector.broadcast %cst_43 : f32 to vector<16x1xf32>
    %88 = arith.maximumf %86, %87 : vector<16x1xf32>
    %89 = vector.broadcast %79 : vector<16x1xf32> to vector<16x128xf32>
    %90 = arith.subf %75, %89 : vector<16x128xf32>
    %cst_44 = arith.constant 9.99999974E-6 : f32
    %91 = vector.broadcast %cst_44 : f32 to vector<16x1xf32>
    %92 = arith.addf %88, %91 : vector<16x1xf32>
    %93 = math.rsqrt %92 : vector<16x1xf32>
    %94 = vector.broadcast %93 : vector<16x1xf32> to vector<16x128xf32>
    %95 = arith.mulf %90, %94 : vector<16x128xf32>
    %c0_45 = arith.constant 0 : index
    %c0_46 = arith.constant 0 : index
    %96 = vector.load %arg13[%c0_45, %c0_46] : memref<1x128xf32, #tpu.memory_space<vmem>>, vector<1x128xf32>
    %97 = vector.broadcast %96 : vector<1x128xf32> to vector<16x128xf32>
    %98 = arith.mulf %95, %97 : vector<16x128xf32>
    %c0_47 = arith.constant 0 : index
    %c0_48 = arith.constant 0 : index
    %99 = vector.load %arg14[%c0_47, %c0_48] : memref<1x128xf32, #tpu.memory_space<vmem>>, vector<1x128xf32>
    %100 = vector.broadcast %99 : vector<1x128xf32> to vector<16x128xf32>
    %101 = arith.addf %98, %100 : vector<16x128xf32>
    %cst_49 = arith.constant 0.000000e+00 : f32
    %102 = vector.broadcast %cst_49 : f32 to vector<16x128xf32>
    %103 = arith.maximumf %101, %102 : vector<16x128xf32>
    %104 = arith.truncf %103 : vector<16x128xf32> to vector<16x128xbf16>
    %c0_50 = arith.constant 0 : index
    %c0_51 = arith.constant 0 : index
    %105 = vector.load %arg15[%c0_50, %c0_51] : memref<128x128xbf16, #tpu.memory_space<vmem>>, vector<128x128xbf16>
    %cst_52 = arith.constant dense<0.000000e+00> : vector<16x128xf32>
    %106 = tpu.matmul %104, %105, %cst_52 {dimension_numbers = #tpu.dot_dimension_numbers<[1], [0], [0], [1], [0, 0, 1, 1], [], []>} : vector<16x128xbf16>, vector<128x128xbf16>, vector<16x128xf32> -> vector<16x128xf32>
    %c0_53 = arith.constant 0 : index
    %c0_54 = arith.constant 0 : index
    %107 = vector.load %arg16[%c0_53, %c0_54] : memref<1x128xf32, #tpu.memory_space<vmem>>, vector<1x128xf32>
    %108 = vector.broadcast %107 : vector<1x128xf32> to vector<16x128xf32>
    %109 = arith.addf %106, %108 : vector<16x128xf32>
    %110 = math.tanh %109 : vector<16x128xf32>
    %111 = vector.broadcast %0 : f32 to vector<16x128xf32>
    %112 = arith.mulf %110, %111 : vector<16x128xf32>
    %c0_55 = arith.constant 0 : index
    %c0_56 = arith.constant 0 : index
    %113 = vector.load %arg17[%c0_55, %c0_56] : memref<16x128xf32, #tpu.memory_space<vmem>>, vector<16x128xf32>
    tpu.vector_store %arg17[%c0_55, %c0_56], %112 {strides = array<i32>} : memref<16x128xf32, #tpu.memory_space<vmem>>, vector<16x128xf32>,
    return
  }
  func.func @transform_0(%arg0: i32) -> (i32, i32) {
    %c0_i32 = arith.constant 0 : i32
    %c0_i32_0 = arith.constant 0 : i32
    %c0_i32_1 = arith.constant 0 : i32
    return %c0_i32, %c0_i32_0 : i32, i32
  }
  func.func @transform_1(%arg0: i32) -> (i32, i32) {
    %c0_i32 = arith.constant 0 : i32
    %c0_i32_0 = arith.constant 0 : i32
    return %arg0, %c0_i32 : i32, i32
  }
  func.func @transform_2(%arg0: i32) -> (i32, i32) {
    %c0_i32 = arith.constant 0 : i32
    %c0_i32_0 = arith.constant 0 : i32
    %c0_i32_1 = arith.constant 0 : i32
    return %c0_i32, %c0_i32_0 : i32, i32
  }
  func.func @transform_3(%arg0: i32) -> (i32, i32) {
    %c0_i32 = arith.constant 0 : i32
    %c0_i32_0 = arith.constant 0 : i32
    %c0_i32_1 = arith.constant 0 : i32
    return %c0_i32, %c0_i32_0 : i32, i32
  }
  func.func @transform_4(%arg0: i32) -> (i32, i32) {
    %c0_i32 = arith.constant 0 : i32
    %c0_i32_0 = arith.constant 0 : i32
    %c0_i32_1 = arith.constant 0 : i32
    return %c0_i32, %c0_i32_0 : i32, i32
  }
  func.func @transform_5(%arg0: i32) -> (i32, i32) {
    %c0_i32 = arith.constant 0 : i32
    %c0_i32_0 = arith.constant 0 : i32
    %c0_i32_1 = arith.constant 0 : i32
    return %c0_i32, %c0_i32_0 : i32, i32
  }
  func.func @transform_6(%arg0: i32) -> (i32, i32) {
    %c0_i32 = arith.constant 0 : i32
    %c0_i32_0 = arith.constant 0 : i32
    %c0_i32_1 = arith.constant 0 : i32
    return %c0_i32, %c0_i32_0 : i32, i32
  }
  func.func @transform_7(%arg0: i32) -> (i32, i32) {
    %c0_i32 = arith.constant 0 : i32
    %c0_i32_0 = arith.constant 0 : i32
    %c0_i32_1 = arith.constant 0 : i32
    return %c0_i32, %c0_i32_0 : i32, i32
  }
  func.func @transform_8(%arg0: i32) -> (i32, i32) {
    %c0_i32 = arith.constant 0 : i32
    %c0_i32_0 = arith.constant 0 : i32
    %c0_i32_1 = arith.constant 0 : i32
    return %c0_i32, %c0_i32_0 : i32, i32
  }
  func.func @transform_9(%arg0: i32) -> (i32, i32) {
    %c0_i32 = arith.constant 0 : i32
    %c0_i32_0 = arith.constant 0 : i32
    %c0_i32_1 = arith.constant 0 : i32
    return %c0_i32, %c0_i32_0 : i32, i32
  }
  func.func @transform_10(%arg0: i32) -> (i32, i32) {
    %c0_i32 = arith.constant 0 : i32
    %c0_i32_0 = arith.constant 0 : i32
    %c0_i32_1 = arith.constant 0 : i32
    return %c0_i32, %c0_i32_0 : i32, i32
  }
  func.func @transform_11(%arg0: i32) -> (i32, i32) {
    %c0_i32 = arith.constant 0 : i32
    %c0_i32_0 = arith.constant 0 : i32
    %c0_i32_1 = arith.constant 0 : i32
    return %c0_i32, %c0_i32_0 : i32, i32
  }
  func.func @transform_12(%arg0: i32) -> (i32, i32) {
    %c0_i32 = arith.constant 0 : i32
    %c0_i32_0 = arith.constant 0 : i32
    %c0_i32_1 = arith.constant 0 : i32
    return %c0_i32, %c0_i32_0 : i32, i32
  }
  func.func @transform_13(%arg0: i32) -> (i32, i32) {
    %c0_i32 = arith.constant 0 : i32
    %c0_i32_0 = arith.constant 0 : i32
    %c0_i32_1 = arith.constant 0 : i32
    return %c0_i32, %c0_i32_0 : i32, i32
  }
  func.func @transform_14(%arg0: i32) -> (i32, i32) {
    %c0_i32 = arith.constant 0 : i32
    %c0_i32_0 = arith.constant 0 : i32
    %c0_i32_1 = arith.constant 0 : i32
    return %c0_i32, %c0_i32_0 : i32, i32
  }
  func.func @transform_15(%arg0: i32) -> (i32, i32) {
    %c0_i32 = arith.constant 0 : i32
    %c0_i32_0 = arith.constant 0 : i32
    %c0_i32_1 = arith.constant 0 : i32
    return %c0_i32, %c0_i32_0 : i32, i32
  }
  func.func @transform_16(%arg0: i32) -> (i32, i32) {
    %c0_i32 = arith.constant 0 : i32
    %c0_i32_0 = arith.constant 0 : i32
    return %arg0, %c0_i32 : i32, i32
  }
}

</mosaic_0001>

<llo_original>
// kernel: tpu_custom_call.1
$region0: #{tpu_custom_call.1}
  #allocation0 [shape = 'u32[]', space=smem, size = 0x4, offset = 0x4, fixed_abs, tag = 'smem constant byte address 0x4 - core index']
  #allocation1 [shape = 'u32[72,128]{1,0:T(1,128)}', space=vmem, size = 0x9000, scoped, tag = 'internal scratch']
  #allocation2 [shape = 'f32[1,1]{1,0:T(1,128)S(6)}', space=smem, size = 0x200, scoped, tag = 'scoped memory for tpu_custom_call.1']
  %s0 = inlined_call_operand.<no memory space> [shape: f32[1,1], index: 0, kind: input, shape index: {}]
  %s1 = inlined_call_operand.hbm [shape: f32[16,16], index: 1, kind: input, shape index: {}]
  %s2 = inlined_call_operand.hbm [shape: bf16[16,128], index: 2, kind: input, shape index: {}]
  %s3 = inlined_call_operand.vmem [shape: f32[1,128], index: 3, kind: input, shape index: {}]
  %s4 = inlined_call_operand.vmem [shape: f32[1,128], index: 4, kind: input, shape index: {}]
  %s5 = inlined_call_operand.vmem [shape: f32[1,128], index: 5, kind: input, shape index: {}]
  %s6 = inlined_call_operand.hbm [shape: bf16[128,128], index: 6, kind: input, shape index: {}]
  %s7 = inlined_call_operand.vmem [shape: f32[1,128], index: 7, kind: input, shape index: {}]
  %s8 = inlined_call_operand.vmem [shape: f32[1,128], index: 8, kind: input, shape index: {}]
  %s9 = inlined_call_operand.vmem [shape: f32[1,128], index: 9, kind: input, shape index: {}]
  %s10 = inlined_call_operand.hbm [shape: bf16[128,128], index: 10, kind: input, shape index: {}]
  %s11 = inlined_call_operand.vmem [shape: f32[1,128], index: 11, kind: input, shape index: {}]
  %s12 = inlined_call_operand.vmem [shape: f32[1,128], index: 12, kind: input, shape index: {}]
  %s13 = inlined_call_operand.vmem [shape: f32[1,128], index: 13, kind: input, shape index: {}]
  %s14 = inlined_call_operand.hbm [shape: bf16[128,128], index: 14, kind: input, shape index: {}]
  %s15 = inlined_call_operand.vmem [shape: f32[1,128], index: 15, kind: input, shape index: {}]
  %s16 = inlined_call_operand.hbm [shape: f32[16,128], index: 16, kind: output, shape index: {}]
  %s17 = sld [smem:[#allocation0]]
  $region94: #{tpu_custom_call.1} parent=0
    _
  %s19 = ssub.s32 1, %s17
  %s20 = scalar_select 0, %s19, %s17
  %21 = sst [smem:[#allocation2]] %s0
  $region1: #{tpu_custom_call.1} parent=0
    #allocation3 [shape = 'u8[8192]{0}', space=vmem, size = 0x2000, scoped, tag = 'input window, operand 1, single buffered']
    #allocation4 [shape = 's32[1]{0}', space=sflag, size = 0x4, scoped, tag = 'scoped memory for tpu_custom_call.1']
    #allocation5 [shape = 's32[1]{0}', space=sflag, size = 0x4, scoped, tag = 'scoped memory for tpu_custom_call.1']
    #allocation6 [shape = 'u8[4096]{0}', space=vmem, size = 0x1000, scoped, tag = 'input window, operand 2, single buffered']
    #allocation7 [shape = 's32[1]{0}', space=sflag, size = 0x4, scoped, tag = 'scoped memory for tpu_custom_call.1']
    #allocation8 [shape = 'u8[32768]{0}', space=vmem, size = 0x8000, scoped, tag = 'input window, operand 6, single buffered']
    #allocation9 [shape = 'u8[32768]{0}', space=vmem, size = 0x8000, scoped, tag = 'input window, operand 10, single buffered']
    #allocation10 [shape = 's32[1]{0}', space=sflag, size = 0x4, scoped, tag = 'scoped memory for tpu_custom_call.1']
    #allocation11 [shape = 'u8[32768]{0}', space=vmem, size = 0x8000, scoped, tag = 'input window, operand 14, single buffered']
    #allocation12 [shape = 'u8[8192]{0}', space=vmem, size = 0x2000, scoped, tag = 'output window, operand 0, single buffered']
    %22 = vsyncpa [#allocation4], 0
    %23 = vsyncpa [#allocation7], 0
    %24 = vsyncpa [#allocation10], 0
    %25 = vsyncpa [#allocation5], 0
    // Predicated region
    $region2: #{tpu_custom_call.1} parent=1 // pred_check
      _
    $region3: #{tpu_custom_call.1} parent=1 // pred_check_branch
      %27 = sbr.rel (0) target = $region5
    $region4: #{tpu_custom_call.1} parent=1 // pred_region
      _
    $region5: #{tpu_custom_call.1} parent=1 // pred_fallthru
      _
    // Predicated region
    $region6: #{tpu_custom_call.1} parent=1 // pred_check
      _
    $region7: #{tpu_custom_call.1} parent=1 // pred_check_branch
      %29 = sbr.rel (0) target = $region9
    $region8: #{tpu_custom_call.1} parent=1 // pred_region
      %31 = vsyncadd [#allocation4], 0
      %s32 = sshll.u32 %s1, 4
      %s33 = int_to_ptr.hbm [resolvable:$true] %s32
      %s34 = sshll.u32 [#allocation3], 4
      %s35 = int_to_ptr.vmem [resolvable:$true] %s34
      %40 = dma.hbm_to_vmem [thread:$0]  %s33, 256, %s35, [#allocation4], 128, 128, 8
    $region9: #{tpu_custom_call.1} parent=1 // pred_fallthru
      _
    // Predicated region
    $region10: #{tpu_custom_call.1} parent=1 // pred_check
      _
    $region11: #{tpu_custom_call.1} parent=1 // pred_check_branch
      %42 = sbr.rel (0) target = $region13
    $region12: #{tpu_custom_call.1} parent=1 // pred_region
      %44 = vsyncadd [#allocation7], 0
      %s45 = sshll.u32 %s2, 4
      %s46 = int_to_ptr.hbm [resolvable:$true] %s45
      %s47 = sshll.u32 [#allocation6], 4
      %s48 = int_to_ptr.vmem [resolvable:$true] %s47
      %53 = dma.hbm_to_vmem [thread:$0]  %s46, 128, %s48, [#allocation7], 64, 64, 4
    $region13: #{tpu_custom_call.1} parent=1 // pred_fallthru
      _
    // Predicated region
    $region14: #{tpu_custom_call.1} parent=1 // pred_check
      _
    $region15: #{tpu_custom_call.1} parent=1 // pred_check_branch
      %55 = sbr.rel (0) target = $region17
    $region16: #{tpu_custom_call.1} parent=1 // pred_region
      _
    $region17: #{tpu_custom_call.1} parent=1 // pred_fallthru
      _
    // Predicated region
    $region18: #{tpu_custom_call.1} parent=1 // pred_check
      _
    $region19: #{tpu_custom_call.1} parent=1 // pred_check_branch
      %57 = sbr.rel (0) target = $region21
    $region20: #{tpu_custom_call.1} parent=1 // pred_region
      _
    $region21: #{tpu_custom_call.1} parent=1 // pred_fallthru
      _
    // Predicated region
    $region22: #{tpu_custom_call.1} parent=1 // pred_check
      _
    $region23: #{tpu_custom_call.1} parent=1 // pred_check_branch
      %59 = sbr.rel (0) target = $region25
    $region24: #{tpu_custom_call.1} parent=1 // pred_region
      _
    $region25: #{tpu_custom_call.1} parent=1 // pred_fallthru
      _
    // Predicated region
    $region26: #{tpu_custom_call.1} parent=1 // pred_check
      _
    $region27: #{tpu_custom_call.1} parent=1 // pred_check_branch
      %61 = sbr.rel (0) target = $region29
    $region28: #{tpu_custom_call.1} parent=1 // pred_region
      %63 = vsyncadd [#allocation7], 0
      %s64 = sshll.u32 %s6, 4
      %s65 = int_to_ptr.hbm [resolvable:$true] %s64
      %s66 = sshll.u32 [#allocation8], 4
      %s67 = int_to_ptr.vmem [resolvable:$true] %s66
      %72 = dma.hbm_to_vmem [thread:$0]  %s65, 1024, %s67, [#allocation7], 64, 64, 4
    $region29: #{tpu_custom_call.1} parent=1 // pred_fallthru
      _
    // Predicated region
    $region30: #{tpu_custom_call.1} parent=1 // pred_check
      _
    $region31: #{tpu_custom_call.1} parent=1 // pred_check_branch
      %74 = sbr.rel (0) target = $region33
    $region32: #{tpu_custom_call.1} parent=1 // pred_region
      _
    $region33: #{tpu_custom_call.1} parent=1 // pred_fallthru
      _
    // Predicated region
    $region34: #{tpu_custom_call.1} parent=1 // pred_check
      _
    $region35: #{tpu_custom_call.1} parent=1 // pred_check_branch
      %76 = sbr.rel (0) target = $region37
    $region36: #{tpu_custom_call.1} parent=1 // pred_region
      _
    $region37: #{tpu_custom_call.1} parent=1 // pred_fallthru
      _
    // Predicated region
    $region38: #{tpu_custom_call.1} parent=1 // pred_check
      _
    $region39: #{tpu_custom_call.1} parent=1 // pred_check_branch
      %78 = sbr.rel (0) target = $region41
    $region40: #{tpu_custom_call.1} parent=1 // pred_region
      _
    $region41: #{tpu_custom_call.1} parent=1 // pred_fallthru
      _
    // Predicated region
    $region42: #{tpu_custom_call.1} parent=1 // pred_check
      _
    $region43: #{tpu_custom_call.1} parent=1 // pred_check_branch
      %80 = sbr.rel (0) target = $region45
    $region44: #{tpu_custom_call.1} parent=1 // pred_region
      %82 = vsyncadd [#allocation10], 0
      %s83 = sshll.u32 %s10, 4
      %s84 = int_to_ptr.hbm [resolvable:$true] %s83
      %s85 = sshll.u32 [#allocation9], 4
      %s86 = int_to_ptr.vmem [resolvable:$true] %s85
      %91 = dma.hbm_to_vmem [thread:$0]  %s84, 1024, %s86, [#allocation10], 64, 64, 4
    $region45: #{tpu_custom_call.1} parent=1 // pred_fallthru
      _
    // Predicated region
    $region46: #{tpu_custom_call.1} parent=1 // pred_check
      _
    $region47: #{tpu_custom_call.1} parent=1 // pred_check_branch
      %93 = sbr.rel (0) target = $region49
    $region48: #{tpu_custom_call.1} parent=1 // pred_region
      _
    $region49: #{tpu_custom_call.1} parent=1 // pred_fallthru
      _
    // Predicated region
    $region50: #{tpu_custom_call.1} parent=1 // pred_check
      _
    $region51: #{tpu_custom_call.1} parent=1 // pred_check_branch
      %95 = sbr.rel (0) target = $region53
    $region52: #{tpu_custom_call.1} parent=1 // pred_region
      _
    $region53: #{tpu_custom_call.1} parent=1 // pred_fallthru
      _
    // Predicated region
    $region54: #{tpu_custom_call.1} parent=1 // pred_check
      _
    $region55: #{tpu_custom_call.1} parent=1 // pred_check_branch
      %97 = sbr.rel (0) target = $region57
    $region56: #{tpu_custom_call.1} parent=1 // pred_region
      _
    $region57: #{tpu_custom_call.1} parent=1 // pred_fallthru
      _
    // Predicated region
    $region58: #{tpu_custom_call.1} parent=1 // pred_check
      _
    $region59: #{tpu_custom_call.1} parent=1 // pred_check_branch
      %99 = sbr.rel (0) target = $region61
    $region60: #{tpu_custom_call.1} parent=1 // pred_region
      %101 = vsyncadd [#allocation10], 0
      %s102 = sshll.u32 %s14, 4
      %s103 = int_to_ptr.hbm [resolvable:$true] %s102
      %s104 = sshll.u32 [#allocation11], 4
      %s105 = int_to_ptr.vmem [resolvable:$true] %s104
      %110 = dma.hbm_to_vmem [thread:$0]  %s103, 1024, %s105, [#allocation10], 64, 64, 4
    $region61: #{tpu_custom_call.1} parent=1 // pred_fallthru
      _
    // Predicated region
    $region62: #{tpu_custom_call.1} parent=1 // pred_check
      _
    $region63: #{tpu_custom_call.1} parent=1 // pred_check_branch
      %112 = sbr.rel (0) target = $region65
    $region64: #{tpu_custom_call.1} parent=1 // pred_region
      _
    $region65: #{tpu_custom_call.1} parent=1 // pred_fallthru
      _
    // Predicated region
    $region66: #{tpu_custom_call.1} parent=1 // pred_check
      _
    $region67: #{tpu_custom_call.1} parent=1 // pred_check_branch
      %114 = sbr.rel (0) target = $region69
    $region68: #{tpu_custom_call.1} parent=1 // pred_region
      %116 = dma.done [#allocation4], 256
    $region69: #{tpu_custom_call.1} parent=1 // pred_fallthru
      _
    // Predicated region
    $region70: #{tpu_custom_call.1} parent=1 // pred_check
      _
    $region71: #{tpu_custom_call.1} parent=1 // pred_check_branch
      %118 = sbr.rel (0) target = $region73
    $region72: #{tpu_custom_call.1} parent=1 // pred_region
      %120 = dma.done [#allocation7], 128
    $region73: #{tpu_custom_call.1} parent=1 // pred_fallthru
      _
    // Predicated region
    $region74: #{tpu_custom_call.1} parent=1 // pred_check
      _
    $region75: #{tpu_custom_call.1} parent=1 // pred_check_branch
      %122 = sbr.rel (0) target = $region77
    $region76: #{tpu_custom_call.1} parent=1 // pred_region
      %124 = dma.done [#allocation7], 1024
    $region77: #{tpu_custom_call.1} parent=1 // pred_fallthru
      _
    // Predicated region
    $region78: #{tpu_custom_call.1} parent=1 // pred_check
      _
    $region79: #{tpu_custom_call.1} parent=1 // pred_check_branch
      %126 = sbr.rel (0) target = $region81
    $region80: #{tpu_custom_call.1} parent=1 // pred_region
      %128 = dma.done [#allocation10], 1024
    $region81: #{tpu_custom_call.1} parent=1 // pred_fallthru
      _
    // Predicated region
    $region82: #{tpu_custom_call.1} parent=1 // pred_check
      _
    $region83: #{tpu_custom_call.1} parent=1 // pred_check_branch
      %130 = sbr.rel (0) target = $region85
    $region84: #{tpu_custom_call.1} parent=1 // pred_region
      %132 = dma.done [#allocation10], 1024
    $region85: #{tpu_custom_call.1} parent=1 // pred_fallthru
      _
    %s134 = sld [smem:[#allocation2]]
    %v135 = vld [vmem:[#allocation3] sm:$0xff]
    %v136 = vld [vmem:[#allocation3 + $0x8] sm:$0xff]
    %v137 = vpack.c.bf16 %v136, %v135
    %v138 = vld [vmem:[#allocation6] sm:$0xf]
    %v139 = vld [vmem:[#allocation6 + $0x4] sm:$0xf]
    %v140 = vld [vmem:[%s3] sm:$0x1]
    %v142 = vperm.slane %v140, 0
    %v146 = vunpack.c.l.b16 %v138
    %v147 = vunpack.c.l.b16 %v139
    %v148 = vpack.c.b16 %v147, %v146
    %vm150 = vcmask 130048
    %v152 = vsel %vm150, %v137, 0
    %154 = vmatpush.bf16.msra.mxu0 0
    %155 = vmatpush.bf16.msra.mxu0 0
    %156 = vmatpush.bf16.msra.mxu0 0
    %157 = vmatpush.bf16.msra.mxu0 0
    %158 = vmatpush.bf16.msra.mxu0 0
    %159 = vmatpush.bf16.msra.mxu0 0
    %160 = vmatpush.bf16.msra.mxu0 0
    %161 = vmatpush.bf16.msra.mxu0 %v148
    %162 = vmatmul.bf16.gmra.mxu0 %v152
    %v163 = vpop.f32.mrf.mxu0
    %v164 = vadd.f32 %v142, %v163
    %v165 = vpop.f32.mrf.mxu0
    %v166 = vadd.f32 %v142, %v165
    %167 = vdwg.mxu0
    %168 = vadd.xlane.f32.xlu0 %v164
    %v169 = vpop.xlane.xlu0 %168
    %170 = vadd.xlane.f32.xlu0 %v166
    %v171 = vpop.xlane.xlu0 %170
    %v172 = vmul.f32 %v169, 0.03125
    %v173 = vmul.f32 %v171, 0.03125
    %v174 = vmul.f32 %v164, %v164
    %v175 = vmul.f32 %v166, %v166
    %176 = vadd.xlane.f32.xlu0 %v174
    %v177 = vpop.xlane.xlu0 %176
    %178 = vadd.xlane.f32.xlu0 %v175
    %v179 = vpop.xlane.xlu0 %178
    %v180 = vmul.f32 %v177, 0.03125
    %v181 = vmul.f32 %v179, 0.03125
    %v182 = vmul.f32 %v172, %v172
    %v183 = vmul.f32 %v173, %v173
    %v184 = vsub.f32 %v180, %v182
    %v185 = vsub.f32 %v181, %v183
    %v186 = vmax.f32 %v184, 0.0
    %v187 = vmax.f32 %v185, 0.0
    %v188 = vsub.f32 %v164, %v172
    %v189 = vsub.f32 %v166, %v173
    %v190 = vadd.f32 %v186, 1e-05
    %v191 = vadd.f32 %v187, 1e-05
    %v192 = vrsqrt.pop %v190
    %v193 = vmul.f32 %v192, %v190
    %v194 = vmul.f32 %v193, %v192
    %v195 = vmul.f32 0.5, %v194
    %v196 = vsub.f32 1.5, %v195
    %v197 = vmul.f32 %v192, %v196
    %vm198 = vweird.f32 %v190
    %vm199 = vweird.f32 %v192
    %vm200 = vmor %vm198, %vm199
    %v201 = vsel %vm200, %v192, %v197
    %v202 = vrsqrt.pop %v191
    %v203 = vmul.f32 %v202, %v191
    %v204 = vmul.f32 %v203, %v202
    %v205 = vmul.f32 0.5, %v204
    %v206 = vsub.f32 1.5, %v205
    %v207 = vmul.f32 %v202, %v206
    %vm208 = vweird.f32 %v191
    %vm209 = vweird.f32 %v202
    %vm210 = vmor %vm208, %vm209
    %v211 = vsel %vm210, %v202, %v207
    %v212 = vmul.f32 %v188, %v201
    %v213 = vmul.f32 %v189, %v211
    %v214 = vld [vmem:[%s4] sm:$0x1]
    %v216 = vperm.slane %v214, 0
    %v218 = vmul.f32 %v212, %v216
    %v219 = vmul.f32 %v213, %v216
    %v220 = vld [vmem:[%s5] sm:$0x1]
    %v222 = vperm.slane %v220, 0
    %v224 = vadd.f32 %v218, %v222
    %v225 = vadd.f32 %v219, %v222
    %v226 = vmax.f32 %v224, 0.0
    %v227 = vmax.f32 %v225, 0.0
    %v228 = vpack.c.bf16 %v227, %v226
    %v229 = vld [vmem:[#allocation8] sm:$0xf]
    %v230 = vld [vmem:[#allocation8 + $0x4] sm:$0xf]
    %v231 = vld [vmem:[#allocation8 + $0x8] sm:$0xf]
    %v232 = vld [vmem:[#allocation8 + $0xc] sm:$0xf]
    %v233 = vld [vmem:[#allocation8 + $0x10] sm:$0xf]
    %v234 = vld [vmem:[#allocation8 + $0x14] sm:$0xf]
    %v235 = vld [vmem:[#allocation8 + $0x18] sm:$0xf]
    %v236 = vld [vmem:[#allocation8 + $0x1c] sm:$0xf]
    %v237 = vld [vmem:[#allocation8 + $0x20] sm:$0xf]
    %v238 = vld [vmem:[#allocation8 + $0x24] sm:$0xf]
    %v239 = vld [vmem:[#allocation8 + $0x28] sm:$0xf]
    %v240 = vld [vmem:[#allocation8 + $0x2c] sm:$0xf]
    %v241 = vld [vmem:[#allocation8 + $0x30] sm:$0xf]
    %v242 = vld [vmem:[#allocation8 + $0x34] sm:$0xf]
    %v243 = vld [vmem:[#allocation8 + $0x38] sm:$0xf]
    %v244 = vld [vmem:[#allocation8 + $0x3c] sm:$0xf]
    %v245 = vld [vmem:[%s7] sm:$0x1]
    %v247 = vperm.slane %v245, 0
    %v265 = vunpack.c.l.b16 %v229
    %v266 = vunpack.c.l.b16 %v230
    %v267 = vunpack.c.l.b16 %v231
    %v268 = vunpack.c.l.b16 %v232
    %v269 = vunpack.c.l.b16 %v233
    %v270 = vunpack.c.l.b16 %v234
    %v271 = vunpack.c.l.b16 %v235
    %v272 = vunpack.c.l.b16 %v236
    %v273 = vunpack.c.l.b16 %v237
    %v274 = vunpack.c.l.b16 %v238
    %v275 = vunpack.c.l.b16 %v239
    %v276 = vunpack.c.l.b16 %v240
    %v277 = vunpack.c.l.b16 %v241
    %v278 = vunpack.c.l.b16 %v242
    %v279 = vunpack.c.l.b16 %v243
    %v280 = vunpack.c.l.b16 %v244
    %v281 = vpack.c.b16 %v266, %v265
    %v282 = vpack.c.b16 %v268, %v267
    %v283 = vpack.c.b16 %v270, %v269
    %v284 = vpack.c.b16 %v272, %v271
    %v285 = vpack.c.b16 %v274, %v273
    %v286 = vpack.c.b16 %v276, %v275
    %v287 = vpack.c.b16 %v278, %v277
    %v288 = vpack.c.b16 %v280, %v279
    %297 = vmatpush.bf16.msra.mxu0 %v288
    %298 = vmatpush.bf16.msra.mxu0 %v287
    %299 = vmatpush.bf16.msra.mxu0 %v286
    %300 = vmatpush.bf16.msra.mxu0 %v285
    %301 = vmatpush.bf16.msra.mxu0 %v284
    %302 = vmatpush.bf16.msra.mxu0 %v283
    %303 = vmatpush.bf16.msra.mxu0 %v282
    %304 = vmatpush.bf16.msra.mxu0 %v281
    %305 = vmatmul.bf16.gmra.mxu0 %v228
    %v306 = vpop.f32.mrf.mxu0
    %v307 = vadd.f32 %v247, %v306
    %v308 = vpop.f32.mrf.mxu0
    %v309 = vadd.f32 %v247, %v308
    %310 = vdwg.mxu0
    %311 = vadd.xlane.f32.xlu0 %v307
    %v312 = vpop.xlane.xlu0 %311
    %313 = vadd.xlane.f32.xlu0 %v309
    %v314 = vpop.xlane.xlu0 %313
    %v315 = vmul.f32 %v312, 0.03125
    %v316 = vmul.f32 %v314, 0.03125
    %v317 = vmul.f32 %v307, %v307
    %v318 = vmul.f32 %v309, %v309
    %319 = vadd.xlane.f32.xlu0 %v317
    %v320 = vpop.xlane.xlu0 %319
    %321 = vadd.xlane.f32.xlu0 %v318
    %v322 = vpop.xlane.xlu0 %321
    %v323 = vmul.f32 %v320, 0.03125
    %v324 = vmul.f32 %v322, 0.03125
    %v325 = vmul.f32 %v315, %v315
    %v326 = vmul.f32 %v316, %v316
    %v327 = vsub.f32 %v323, %v325
    %v328 = vsub.f32 %v324, %v326
    %v329 = vmax.f32 %v327, 0.0
    %v330 = vmax.f32 %v328, 0.0
    %v331 = vsub.f32 %v307, %v315
    %v332 = vsub.f32 %v309, %v316
    %v333 = vadd.f32 %v329, 1e-05
    %v334 = vadd.f32 %v330, 1e-05
    %v335 = vrsqrt.pop %v333
    %v336 = vmul.f32 %v335, %v333
    %v337 = vmul.f32 %v336, %v335
    %v338 = vmul.f32 0.5, %v337
    %v339 = vsub.f32 1.5, %v338
    %v340 = vmul.f32 %v335, %v339
    %vm341 = vweird.f32 %v333
    %vm342 = vweird.f32 %v335
    %vm343 = vmor %vm341, %vm342
    %v344 = vsel %vm343, %v335, %v340
    %v345 = vrsqrt.pop %v334
    %v346 = vmul.f32 %v345, %v334
    %v347 = vmul.f32 %v346, %v345
    %v348 = vmul.f32 0.5, %v347
    %v349 = vsub.f32 1.5, %v348
    %v350 = vmul.f32 %v345, %v349
    %vm351 = vweird.f32 %v334
    %vm352 = vweird.f32 %v345
    %vm353 = vmor %vm351, %vm352
    %v354 = vsel %vm353, %v345, %v350
    %v355 = vmul.f32 %v331, %v344
    %v356 = vmul.f32 %v332, %v354
    %v357 = vld [vmem:[%s8] sm:$0x1]
    %v359 = vperm.slane %v357, 0
    %v361 = vmul.f32 %v355, %v359
    %v362 = vmul.f32 %v356, %v359
    %v363 = vld [vmem:[%s9] sm:$0x1]
    %v365 = vperm.slane %v363, 0
    %v367 = vadd.f32 %v361, %v365
    %v368 = vadd.f32 %v362, %v365
    %v369 = vmax.f32 %v367, 0.0
    %v370 = vmax.f32 %v368, 0.0
    %v371 = vpack.c.bf16 %v370, %v369
    %v372 = vld [vmem:[#allocation9] sm:$0xf]
    %v373 = vld [vmem:[#allocation9 + $0x4] sm:$0xf]
    %v374 = vld [vmem:[#allocation9 + $0x8] sm:$0xf]
    %v375 = vld [vmem:[#allocation9 + $0xc] sm:$0xf]
    %v376 = vld [vmem:[#allocation9 + $0x10] sm:$0xf]
    %v377 = vld [vmem:[#allocation9 + $0x14] sm:$0xf]
    %v378 = vld [vmem:[#allocation9 + $0x18] sm:$0xf]
    %v379 = vld [vmem:[#allocation9 + $0x1c] sm:$0xf]
    %v380 = vld [vmem:[#allocation9 + $0x20] sm:$0xf]
    %v381 = vld [vmem:[#allocation9 + $0x24] sm:$0xf]
    %v382 = vld [vmem:[#allocation9 + $0x28] sm:$0xf]
    %v383 = vld [vmem:[#allocation9 + $0x2c] sm:$0xf]
    %v384 = vld [vmem:[#allocation9 + $0x30] sm:$0xf]
    %v385 = vld [vmem:[#allocation9 + $0x34] sm:$0xf]
    %v386 = vld [vmem:[#allocation9 + $0x38] sm:$0xf]
    %v387 = vld [vmem:[#allocation9 + $0x3c] sm:$0xf]
    %v388 = vld [vmem:[%s11] sm:$0x1]
    %v390 = vperm.slane %v388, 0
    %v408 = vunpack.c.l.b16 %v372
    %v409 = vunpack.c.l.b16 %v373
    %v410 = vunpack.c.l.b16 %v374
    %v411 = vunpack.c.l.b16 %v375
    %v412 = vunpack.c.l.b16 %v376
    %v413 = vunpack.c.l.b16 %v377
    %v414 = vunpack.c.l.b16 %v378
    %v415 = vunpack.c.l.b16 %v379
    %v416 = vunpack.c.l.b16 %v380
    %v417 = vunpack.c.l.b16 %v381
    %v418 = vunpack.c.l.b16 %v382
    %v419 = vunpack.c.l.b16 %v383
    %v420 = vunpack.c.l.b16 %v384
    %v421 = vunpack.c.l.b16 %v385
    %v422 = vunpack.c.l.b16 %v386
    %v423 = vunpack.c.l.b16 %v387
    %v424 = vpack.c.b16 %v409, %v408
    %v425 = vpack.c.b16 %v411, %v410
    %v426 = vpack.c.b16 %v413, %v412
    %v427 = vpack.c.b16 %v415, %v414
    %v428 = vpack.c.b16 %v417, %v416
    %v429 = vpack.c.b16 %v419, %v418
    %v430 = vpack.c.b16 %v421, %v420
    %v431 = vpack.c.b16 %v423, %v422
    %440 = vmatpush.bf16.msra.mxu0 %v431
    %441 = vmatpush.bf16.msra.mxu0 %v430
    %442 = vmatpush.bf16.msra.mxu0 %v429
    %443 = vmatpush.bf16.msra.mxu0 %v428
    %444 = vmatpush.bf16.msra.mxu0 %v427
    %445 = vmatpush.bf16.msra.mxu0 %v426
    %446 = vmatpush.bf16.msra.mxu0 %v425
    %447 = vmatpush.bf16.msra.mxu0 %v424
    %448 = vmatmul.bf16.gmra.mxu0 %v371
    %v449 = vpop.f32.mrf.mxu0
    %v450 = vadd.f32 %v390, %v449
    %v451 = vpop.f32.mrf.mxu0
    %v452 = vadd.f32 %v390, %v451
    %453 = vdwg.mxu0
    %454 = vadd.xlane.f32.xlu0 %v450
    %v455 = vpop.xlane.xlu0 %454
    %456 = vadd.xlane.f32.xlu0 %v452
    %v457 = vpop.xlane.xlu0 %456
    %v458 = vmul.f32 %v455, 0.0625
    %v459 = vmul.f32 %v457, 0.0625
    %v460 = vmul.f32 %v450, %v450
    %v461 = vmul.f32 %v452, %v452
    %462 = vadd.xlane.f32.xlu0 %v460
    %v463 = vpop.xlane.xlu0 %462
    %464 = vadd.xlane.f32.xlu0 %v461
    %v465 = vpop.xlane.xlu0 %464
    %v466 = vmul.f32 %v463, 0.0625
    %v467 = vmul.f32 %v465, 0.0625
    %v468 = vmul.f32 %v458, %v458
    %v469 = vmul.f32 %v459, %v459
    %v470 = vsub.f32 %v466, %v468
    %v471 = vsub.f32 %v467, %v469
    %v472 = vmax.f32 %v470, 0.0
    %v473 = vmax.f32 %v471, 0.0
    %v474 = vsub.f32 %v450, %v458
    %v475 = vsub.f32 %v452, %v459
    %v476 = vadd.f32 %v472, 1e-05
    %v477 = vadd.f32 %v473, 1e-05
    %v478 = vrsqrt.pop %v476
    %v479 = vmul.f32 %v478, %v476
    %v480 = vmul.f32 %v479, %v478
    %v481 = vmul.f32 0.5, %v480
    %v482 = vsub.f32 1.5, %v481
    %v483 = vmul.f32 %v478, %v482
    %vm484 = vweird.f32 %v476
    %vm485 = vweird.f32 %v478
    %vm486 = vmor %vm484, %vm485
    %v487 = vsel %vm486, %v478, %v483
    %v488 = vrsqrt.pop %v477
    %v489 = vmul.f32 %v488, %v477
    %v490 = vmul.f32 %v489, %v488
    %v491 = vmul.f32 0.5, %v490
    %v492 = vsub.f32 1.5, %v491
    %v493 = vmul.f32 %v488, %v492
    %vm494 = vweird.f32 %v477
    %vm495 = vweird.f32 %v488
    %vm496 = vmor %vm494, %vm495
    %v497 = vsel %vm496, %v488, %v493
    %v498 = vmul.f32 %v474, %v487
    %v499 = vmul.f32 %v475, %v497
    %v500 = vld [vmem:[%s12] sm:$0x1]
    %v502 = vperm.slane %v500, 0
    %v504 = vmul.f32 %v498, %v502
    %v505 = vmul.f32 %v499, %v502
    %v506 = vld [vmem:[%s13] sm:$0x1]
    %v508 = vperm.slane %v506, 0
    %v510 = vadd.f32 %v504, %v508
    %v511 = vadd.f32 %v505, %v508
    %v512 = vmax.f32 %v510, 0.0
    %v513 = vmax.f32 %v511, 0.0
    %v514 = vpack.c.bf16 %v513, %v512
    %v515 = vld [vmem:[#allocation11] sm:$0xf]
    %v516 = vld [vmem:[#allocation11 + $0x4] sm:$0xf]
    %v517 = vld [vmem:[#allocation11 + $0x8] sm:$0xf]
    %v518 = vld [vmem:[#allocation11 + $0xc] sm:$0xf]
    %v519 = vld [vmem:[#allocation11 + $0x10] sm:$0xf]
    %v520 = vld [vmem:[#allocation11 + $0x14] sm:$0xf]
    %v521 = vld [vmem:[#allocation11 + $0x18] sm:$0xf]
    %v522 = vld [vmem:[#allocation11 + $0x1c] sm:$0xf]
    %v523 = vld [vmem:[#allocation11 + $0x20] sm:$0xf]
    %v524 = vld [vmem:[#allocation11 + $0x24] sm:$0xf]
    %v525 = vld [vmem:[#allocation11 + $0x28] sm:$0xf]
    %v526 = vld [vmem:[#allocation11 + $0x2c] sm:$0xf]
    %v527 = vld [vmem:[#allocation11 + $0x30] sm:$0xf]
    %v528 = vld [vmem:[#allocation11 + $0x34] sm:$0xf]
    %v529 = vld [vmem:[#allocation11 + $0x38] sm:$0xf]
    %v530 = vld [vmem:[#allocation11 + $0x3c] sm:$0xf]
    %v531 = vld [vmem:[%s15] sm:$0x1]
    %v533 = vperm.slane %v531, 0
    %v551 = vunpack.c.l.b16 %v515
    %v552 = vunpack.c.l.b16 %v516
    %v553 = vunpack.c.l.b16 %v517
    %v554 = vunpack.c.l.b16 %v518
    %v555 = vunpack.c.l.b16 %v519
    %v556 = vunpack.c.l.b16 %v520
    %v557 = vunpack.c.l.b16 %v521
    %v558 = vunpack.c.l.b16 %v522
    %v559 = vunpack.c.l.b16 %v523
    %v560 = vunpack.c.l.b16 %v524
    %v561 = vunpack.c.l.b16 %v525
    %v562 = vunpack.c.l.b16 %v526
    %v563 = vunpack.c.l.b16 %v527
    %v564 = vunpack.c.l.b16 %v528
    %v565 = vunpack.c.l.b16 %v529
    %v566 = vunpack.c.l.b16 %v530
    %v567 = vpack.c.b16 %v552, %v551
    %v568 = vpack.c.b16 %v554, %v553
    %v569 = vpack.c.b16 %v556, %v555
    %v570 = vpack.c.b16 %v558, %v557
    %v571 = vpack.c.b16 %v560, %v559
    %v572 = vpack.c.b16 %v562, %v561
    %v573 = vpack.c.b16 %v564, %v563
    %v574 = vpack.c.b16 %v566, %v565
    %583 = vmatpush.bf16.msra.mxu0 %v574
    %584 = vmatpush.bf16.msra.mxu0 %v573
    %585 = vmatpush.bf16.msra.mxu0 %v572
    %586 = vmatpush.bf16.msra.mxu0 %v571
    %587 = vmatpush.bf16.msra.mxu0 %v570
    %588 = vmatpush.bf16.msra.mxu0 %v569
    %589 = vmatpush.bf16.msra.mxu0 %v568
    %590 = vmatpush.bf16.msra.mxu0 %v567
    %591 = vmatmul.bf16.gmra.mxu0 %v514
    %v592 = vpop.f32.mrf.mxu0
    %v593 = vadd.f32 %v533, %v592
    %v594 = vpop.f32.mrf.mxu0
    %v595 = vadd.f32 %v533, %v594
    %596 = vdwg.mxu0
    %v597 = vtanh.pop %v593
    %v598 = vtanh.pop %v595
    %v599 = vstv %s134
    %v600 = vmul.f32 %v597, %v599
    %v601 = vmul.f32 %v598, %v599
    %602 = vst [vmem:[#allocation12] sm:$0xff] %v600
    %603 = vst [vmem:[#allocation12 + $0x8] sm:$0xff] %v601
    // Predicated region
    $region86: #{tpu_custom_call.1} parent=1 // pred_check
      _
    $region87: #{tpu_custom_call.1} parent=1 // pred_check_branch
      %605 = sbr.rel (0) target = $region89
    $region88: #{tpu_custom_call.1} parent=1 // pred_region
      %607 = vsyncadd [#allocation5], 0
      %s608 = sshll.u32 [#allocation12], 4
      %s609 = int_to_ptr.vmem [resolvable:$true] %s608
      %s610 = sshll.u32 %s16, 4
      %s611 = int_to_ptr.hbm [resolvable:$true] %s610
      %616 = dma.vmem_to_hbm [thread:$0]  %s609, 256, %s611, [#allocation5], 128, 128, 8
    $region89: #{tpu_custom_call.1} parent=1 // pred_fallthru
      _
    // Predicated region
    $region90: #{tpu_custom_call.1} parent=1 // pred_check
      _
    $region91: #{tpu_custom_call.1} parent=1 // pred_check_branch
      %618 = sbr.rel (0) target = $region93
    $region92: #{tpu_custom_call.1} parent=1 // pred_region
      %620 = dma.done [#allocation5], 256
    $region93: #{tpu_custom_call.1} parent=1 // pred_fallthru
      _
    %621 = vsyncpa [#allocation4], 1
    %622 = vsyncpa [#allocation7], 1
    %623 = vsyncpa [#allocation10], 1
    %624 = vsyncpa [#allocation5], 1

</llo_original>
